<compile_context>
chip_gen: v6e
topology: v6e:2x2x1
jax: 0.10.0
libtpu: 0.0.40
codegen_flags: <defaults>
</compile_context>

<pallas_src>
import functools
import math

import jax
import jax.numpy as jnp
from jax import lax
from jax.experimental import pallas as pl
from jax.experimental.pallas import tpu as pltpu


# ---------------------------------------------------------------------------
# Hardware-aware configuration.
# ---------------------------------------------------------------------------
def _tpu_info():
    try:
        return pltpu.get_tpu_info()
    except Exception:
        return None


def _vmem_capacity_bytes(info):
    if info is not None:
        cap = getattr(info, "vmem_capacity_bytes", None)
        if isinstance(cap, int) and cap > 0:
            return cap
    return 128 * 1024 * 1024  # conservative default (v5e/v6e)


def _num_tensorcores(info):
    if info is None:
        return 1
    for name in ("num_cores", "core_count", "num_tensorcores"):
        v = getattr(info, name, None)
        if isinstance(v, int) and v > 0:
            return v
    return 1


def _vmem_limit(block_bytes, cap, extra=0):
    # in + out double-buffered plus temps/slack, capped by physical headroom.
    need = 6 * block_bytes + extra + (2 << 20)
    return int(min(cap, max(4 << 20, need)))


# ---------------------------------------------------------------------------
# Single-pass fused kernel: one batch image (1, C, H*W) per grid step.
# ---------------------------------------------------------------------------
def _eca_fused_kernel(w_ref, x_ref, o_ref, *, k_size, inv_hw):
    # w_ref: (k_size,) f32 scalar-prefetch (SMEM).
    # x_ref / o_ref: (1, C, H*W) blocks in VMEM (lane-dense last dim).
    x = x_ref[...]
    C = x.shape[1]
    pad = (k_size - 1) // 2

    # AdaptiveAvgPool2d(1): f32-accumulated mean over the spatial (lane) axis,
    # without materializing a full f32 copy of x.
    pooled = jnp.sum(x, axis=-1, dtype=jnp.float32) * inv_hw        # (1, C)

    # Cross-channel conv (zero pad, no bias) as k shifted adds: O(k*C).
    # iota built once; per-tap masks derived from it (no broadcast re-emit).
    idx = lax.broadcasted_iota(jnp.int32, pooled.shape, 1)
    y = jnp.zeros_like(pooled)
    for k in range(k_size):
        d = k - pad
        if d == 0:
            y = y + w_ref[k] * pooled
        else:
            rolled = pltpu.roll(pooled, (-d) % C, axis=1)           # XLU rotate
            valid = jnp.logical_and(idx >= -d, idx < C - d)
            y = y + w_ref[k] * jnp.where(valid, rolled, 0.0)

    gate = jax.nn.sigmoid(y)                                        # (1, C) f32

    # Channel-wise rescale in the input dtype (bf16 stays bf16 on v6e/v7x).
    o_ref[...] = (x * gate[:, :, None].astype(x.dtype)).astype(o_ref.dtype)


def _eca_single_pass(x3, w, *, k_size, vmem_limit):
    B, C, HW = x3.shape
    itemsize = jnp.dtype(x3.dtype).itemsize
    kern = functools.partial(_eca_fused_kernel, k_size=k_size, inv_hw=1.0 / HW)
    cost = pl.CostEstimate(
        flops=int(2 * B * C * HW),
        transcendentals=int(B * C),
        bytes_accessed=int(2 * B * C * HW * itemsize),
    )
    return pl.pallas_call(
        kern,
        out_shape=jax.ShapeDtypeStruct(x3.shape, x3.dtype),
        grid_spec=pltpu.PrefetchScalarGridSpec(
            num_scalar_prefetch=1,
            grid=(B,),
            in_specs=[pl.BlockSpec((1, C, HW), lambda b, _w: (b, 0, 0))],
            out_specs=pl.BlockSpec((1, C, HW), lambda b, _w: (b, 0, 0)),
        ),
        compiler_params=pltpu.CompilerParams(
            dimension_semantics=("parallel",),
            vmem_limit_bytes=vmem_limit,
        ),
        cost_estimate=cost,
    )(w, x3)


# ---------------------------------------------------------------------------
# Two-pass channel-tiled fallback (large activations, v7x VMEM, or B == 1 on
# multi-core parts). Pass 1 pools per channel tile; the tiny O(B*C) gate
# (conv + sigmoid) is done in plain JAX; pass 2 rescales per channel tile.
# ---------------------------------------------------------------------------
def _pool_sum_kernel(x_ref, s_ref):
    # x_ref: (1, c_tile, HW); s_ref: (1, c_tile, 1) f32 per-channel spatial sum.
    s_ref[...] = jnp.sum(x_ref[...], axis=-1, dtype=jnp.float32, keepdims=True)


def _rescale_kernel(g_ref, x_ref, o_ref, *, c_tile):
    # g_ref: (1, C, 1) f32 gate, VMEM-resident across the channel grid axis.
    # x_ref / o_ref: (1, c_tile, HW) blocks.
    c = pl.program_id(1)
    x = x_ref[...]
    start = pl.multiple_of(c * c_tile, c_tile)
    g = g_ref[:, pl.ds(start, c_tile), :]                           # (1, c_tile, 1)
    o_ref[...] = (x * g.astype(x.dtype)).astype(o_ref.dtype)


def _eca_two_pass(x3, w, *, k_size, c_tile, vmem_cap):
    B, C, HW = x3.shape
    n_c = C // c_tile
    pad = (k_size - 1) // 2
    itemsize = jnp.dtype(x3.dtype).itemsize
    tile_bytes = c_tile * HW * itemsize
    # Padded VMEM footprint of the resident per-batch gate block (lane pad 128).
    gate_resident = ((C + 7) // 8) * 8 * 128 * 4

    sums = pl.pallas_call(
        _pool_sum_kernel,
        out_shape=jax.ShapeDtypeStruct((B, C, 1), jnp.float32),
        grid=(B, n_c),
        in_specs=[pl.BlockSpec((1, c_tile, HW), lambda b, c: (b, c, 0))],
        out_specs=pl.BlockSpec((1, c_tile, 1), lambda b, c: (b, c, 0)),
        compiler_params=pltpu.CompilerParams(
            dimension_semantics=("parallel", "parallel"),
            vmem_limit_bytes=_vmem_limit(tile_bytes, (vmem_cap * 3) // 4),
        ),
        cost_estimate=pl.CostEstimate(
            flops=int(B * C * HW),
            transcendentals=0,
            bytes_accessed=int(B * C * HW * itemsize + B * C * 4),
        ),
    )(x3)

    # Tiny O(B*C) gate math in plain JAX (channel conv + sigmoid), all f32.
    pooled = sums[..., 0] * (1.0 / HW)                              # (B, C) f32
    padded = jnp.pad(pooled, ((0, 0), (pad, pad)))
    y = sum(w[k] * padded[:, k:k + C] for k in range(k_size))       # (B, C)
    gate = jax.nn.sigmoid(y)[..., None]                             # (B, C, 1) f32

    kern = functools.partial(_rescale_kernel, c_tile=c_tile)
    return pl.pallas_call(
        kern,
        out_shape=jax.ShapeDtypeStruct(x3.shape, x3.dtype),
        grid=(B, n_c),
        in_specs=[
            # Whole per-batch gate resident in VMEM; re-fetched only when b
            # changes (constant block index across the inner channel axis).
            pl.BlockSpec((1, C, 1), lambda b, c: (b, 0, 0)),
            pl.BlockSpec((1, c_tile, HW), lambda b, c: (b, c, 0)),
        ],
        out_specs=pl.BlockSpec((1, c_tile, HW), lambda b, c: (b, c, 0)),
        compiler_params=pltpu.CompilerParams(
            dimension_semantics=("parallel", "parallel"),
            vmem_limit_bytes=_vmem_limit(tile_bytes, (vmem_cap * 3) // 4,
                                         extra=2 * gate_resident),
        ),
        cost_estimate=pl.CostEstimate(
            flops=int(B * C * HW),
            transcendentals=0,
            bytes_accessed=int(2 * B * C * HW * itemsize + B * C * 4),
        ),
    )(gate, x3)


# ---------------------------------------------------------------------------
# Wrapper.
# ---------------------------------------------------------------------------
def _pick_c_tile(C, HW, itemsize, target_bytes):
    """Largest multiple-of-8 divisor of C whose tile fits the target budget."""
    cands = [c for c in range(8, C + 1, 8) if C % c == 0]
    if not cands:
        # TODO(synk): C with no multiple-of-8 divisor falls back to the full
        # channel dim; add spatial tiling (with a reduction grid axis) if that
        # ever exceeds VMEM for large-resolution inputs.
        return C
    for c in sorted(cands, reverse=True):
        if c * HW * itemsize <= target_bytes:
            return c
    return cands[0]


def eca_attention(x, w, *, k_size=3, force_two_pass=False, c_tile=None):
    """ECA forward. x: (B, C, H, W); w: (k_size,) flattened Conv1d weight."""
    assert k_size % 2 == 1, "ECA Conv1d padding assumes odd k_size"
    B, C, H, W = x.shape
    HW = H * W
    x3 = x.reshape(B, C, HW)                      # lane-dense last dim
    # TODO(synk): for small/odd HW (7x7, 14x14) repack channels into the lane
    # axis (g*HW % 128 == 0) to avoid masked stores / padded vregs.
    itemsize = jnp.dtype(x.dtype).itemsize
    block_bytes = C * HW * itemsize
    wf = w.astype(jnp.float32)

    info = _tpu_info()
    vmem_cap = _vmem_capacity_bytes(info)         # 128 MiB v5e/v6e, 64 MiB v7x
    n_cores = _num_tensorcores(info)
    single_pass_max = vmem_cap // 8               # ~16 MiB (v5e/v6e), ~8 MiB (v7x)
    two_pass_target = max(2 << 20, vmem_cap // 32)

    use_two_pass = force_two_pass or block_bytes > single_pass_max
    # grid=(1,) has no cross-step pipelining and idles the second TensorCore on
    # multi-core parts; prefer the (B, n_c) fully-parallel two-pass there.
    # TODO(synk): replace with a resident-tile single-read fused fallback
    # (manual DMA ring over channel tiles) to keep the 2x HBM-traffic minimum.
    if not use_two_pass and B == 1 and n_cores >= 2:
        if c_tile is not None or _pick_c_tile(C, HW, itemsize, two_pass_target) < C:
            use_two_pass = True

    if use_two_pass:
        if c_tile is None:
            c_tile = _pick_c_tile(C, HW, itemsize, two_pass_target)
        out3 = _eca_two_pass(x3, wf, k_size=k_size, c_tile=c_tile,
                             vmem_cap=vmem_cap)
    else:
        out3 = _eca_single_pass(
            x3, wf, k_size=k_size,
            vmem_limit=_vmem_limit(block_bytes, (vmem_cap * 3) // 4))
    return out3.reshape(B, C, H, W)


def _eca_reference(x, w, *, k_size=3):
    """Pure-JAX reference matching the PyTorch forward."""
    pad = (k_size - 1) // 2
    pooled = jnp.mean(x.astype(jnp.float32), axis=(2, 3))          # (B, C)
    padded = jnp.pad(pooled, ((0, 0), (pad, pad)))                 # (B, C+2*pad)
    C = x.shape[1]
    y = sum(w[k] * padded[:, k:k + C] for k in range(k_size))      # (B, C)
    gate = jax.nn.sigmoid(y)
    return (x.astype(jnp.float32) * gate[:, :, None, None]).astype(x.dtype)


if __name__ == "__main__":
    key = jax.random.PRNGKey(0)
    kx, kw, kx2 = jax.random.split(key, 3)

    k_size = 3
    # Conv1d(1, 1, k_size, bias=False) weight, (1,1,k) flattened to (k,).
    bound = 1.0 / math.sqrt(k_size)
    w = jax.random.uniform(kw, (k_size,), dtype=jnp.float32,
                           minval=-bound, maxval=bound)

    # --- single-pass fused path ---
    B, C, H, W = 2, 4, 16, 16
    x = jax.random.normal(kx, (B, C, H, W), dtype=jnp.float32)
    out = jax.block_until_ready(eca_attention(x, w, k_size=k_size))
    ref = _eca_reference(x, w, k_size=k_size)
    assert out.shape == x.shape and out.dtype == x.dtype
    assert float(jnp.max(jnp.abs(out - ref))) < 1e-5

    # --- two-pass channel-tiled path (forced at a small shape) ---
    B2, C2, H2, W2 = 2, 16, 8, 8
    x2 = jax.random.normal(kx2, (B2, C2, H2, W2), dtype=jnp.float32)
    out2 = jax.block_until_ready(
        eca_attention(x2, w, k_size=k_size, force_two_pass=True, c_tile=8))
    ref2 = _eca_reference(x2, w, k_size=k_size)
    assert out2.shape == x2.shape and out2.dtype == x2.dtype
    assert float(jnp.max(jnp.abs(out2 - ref2))) < 1e-5

    # --- two-pass with auto-picked tile (exercises resident-gate slicing) ---
    x3 = jax.random.normal(kx, (2, 32, 8, 8), dtype=jnp.float32)
    out3 = jax.block_until_ready(
        eca_attention(x3, w, k_size=k_size, force_two_pass=True))
    ref3 = _eca_reference(x3, w, k_size=k_size)
    assert float(jnp.max(jnp.abs(out3 - ref3))) < 1e-5

    print("KERNEL_OK")
</pallas_src>

<mosaic_0001>
module attributes {stable_mosaic.version = 11 : i64} {
  func.func @_eca_fused_kernel(%arg0: i32, %arg1: memref<3xf32, #tpu.memory_space<smem>>, %arg2: memref<1x4x256xf32, #tpu.memory_space<vmem>>, %arg3: memref<1x4x256xf32, #tpu.memory_space<vmem>>) attributes {dimension_semantics = [#tpu.dimension_semantics<parallel>], iteration_bounds = array<i64: 2>, scalar_prefetch = 1 : i64, scratch_operands = 0 : i64, tpu.core_type = #tpu.core_type<tc>, window_params = [{transform_indices = @transform_0, window_bounds = array<i64: 1, 4, 256>}, {transform_indices = @transform_1, window_bounds = array<i64: 1, 4, 256>}]} {
    %c0 = arith.constant 0 : index
    %c0_0 = arith.constant 0 : index
    %c0_1 = arith.constant 0 : index
    %0 = vector.load %arg2[%c0, %c0_0, %c0_1] : memref<1x4x256xf32, #tpu.memory_space<vmem>>, vector<1x4x256xf32>
    %cst = arith.constant dense<0.000000e+00> : vector<1x4xf32>
    %1 = vector.multi_reduction <add>, %0, %cst [2] : vector<1x4x256xf32> to vector<1x4xf32>
    %cst_2 = arith.constant 3.906250e-03 : f32
    %2 = vector.broadcast %cst_2 : f32 to vector<1x4xf32>
    %3 = arith.mulf %1, %2 : vector<1x4xf32>
    %4 = tpu.iota {dimensions = array<i32: 1>} : vector<1x4xi32>
    %cst_3 = arith.constant 0.000000e+00 : f32
    %5 = vector.broadcast %cst_3 : f32 to vector<1x4xf32>
    %c1_i32 = arith.constant 1 : i32
    %6 = tpu.dynamic_rotate %3 by %c1_i32 dim 1 : vector<1x4xf32>, i32 -> vector<1x4xf32>
    %c1_i32_4 = arith.constant 1 : i32
    %7 = vector.broadcast %c1_i32_4 : i32 to vector<1x4xi32>
    %8 = arith.cmpi sge, %4, %7 : vector<1x4xi32>
    %c5_i32 = arith.constant 5 : i32
    %9 = vector.broadcast %c5_i32 : i32 to vector<1x4xi32>
    %10 = arith.cmpi slt, %4, %9 : vector<1x4xi32>
    %11 = arith.andi %8, %10 : vector<1x4xi1>
    %c0_5 = arith.constant 0 : index
    %12 = memref.load %arg1[%c0_5] : memref<3xf32, #tpu.memory_space<smem>>
    %cst_6 = arith.constant 0.000000e+00 : f32
    %13 = vector.broadcast %cst_6 : f32 to vector<1x4xf32>
    %14 = arith.select %11, %6, %13 : vector<1x4xi1>, vector<1x4xf32>
    %15 = vector.broadcast %12 : f32 to vector<1x4xf32>
    %16 = arith.mulf %15, %14 : vector<1x4xf32>
    %17 = arith.addf %5, %16 : vector<1x4xf32>
    %c1 = arith.constant 1 : index
    %18 = memref.load %arg1[%c1] : memref<3xf32, #tpu.memory_space<smem>>
    %19 = vector.broadcast %18 : f32 to vector<1x4xf32>
    %20 = arith.mulf %19, %3 : vector<1x4xf32>
    %21 = arith.addf %17, %20 : vector<1x4xf32>
    %c3_i32 = arith.constant 3 : i32
    %22 = tpu.dynamic_rotate %3 by %c3_i32 dim 1 : vector<1x4xf32>, i32 -> vector<1x4xf32>
    %c-1_i32 = arith.constant -1 : i32
    %23 = vector.broadcast %c-1_i32 : i32 to vector<1x4xi32>
    %24 = arith.cmpi sge, %4, %23 : vector<1x4xi32>
    %c3_i32_7 = arith.constant 3 : i32
    %25 = vector.broadcast %c3_i32_7 : i32 to vector<1x4xi32>
    %26 = arith.cmpi slt, %4, %25 : vector<1x4xi32>
    %27 = arith.andi %24, %26 : vector<1x4xi1>
    %c2 = arith.constant 2 : index
    %28 = memref.load %arg1[%c2] : memref<3xf32, #tpu.memory_space<smem>>
    %cst_8 = arith.constant 0.000000e+00 : f32
    %29 = vector.broadcast %cst_8 : f32 to vector<1x4xf32>
    %30 = arith.select %27, %22, %29 : vector<1x4xi1>, vector<1x4xf32>
    %31 = vector.broadcast %28 : f32 to vector<1x4xf32>
    %32 = arith.mulf %31, %30 : vector<1x4xf32>
    %33 = arith.addf %21, %32 : vector<1x4xf32>
    %34 = arith.negf %33 : vector<1x4xf32>
    %35 = math.exp %34 : vector<1x4xf32>
    %cst_9 = arith.constant 1.000000e+00 : f32
    %36 = vector.broadcast %cst_9 : f32 to vector<1x4xf32>
    %37 = arith.addf %36, %35 : vector<1x4xf32>
    %38 = arith.divf %36, %37 : vector<1x4xf32>
    %39 = vector.shape_cast %38 : vector<1x4xf32> to vector<1x4x1xf32>
    %40 = vector.broadcast %39 : vector<1x4x1xf32> to vector<1x4x256xf32>
    %41 = arith.mulf %0, %40 : vector<1x4x256xf32>
    %c0_10 = arith.constant 0 : index
    %c0_11 = arith.constant 0 : index
    %c0_12 = arith.constant 0 : index
    %42 = vector.load %arg3[%c0_10, %c0_11, %c0_12] : memref<1x4x256xf32, #tpu.memory_space<vmem>>, vector<1x4x256xf32>
    tpu.vector_store %arg3[%c0_10, %c0_11, %c0_12], %41 {strides = array<i32>} : memref<1x4x256xf32, #tpu.memory_space<vmem>>, vector<1x4x256xf32>,
    return
  }
  func.func @transform_0(%arg0: i32, %arg1: memref<3xf32, #tpu.memory_space<smem>>) -> (i32, i32, i32) {
    %c0_i32 = arith.constant 0 : i32
    %c0_i32_0 = arith.constant 0 : i32
    %c0_i32_1 = arith.constant 0 : i32
    return %arg0, %c0_i32, %c0_i32_0 : i32, i32, i32
  }
  func.func @transform_1(%arg0: i32, %arg1: memref<3xf32, #tpu.memory_space<smem>>) -> (i32, i32, i32) {
    %c0_i32 = arith.constant 0 : i32
    %c0_i32_0 = arith.constant 0 : i32
    %c0_i32_1 = arith.constant 0 : i32
    return %arg0, %c0_i32, %c0_i32_0 : i32, i32, i32
  }
}

</mosaic_0001>

<llo_original>
// kernel: tpu_custom_call.1
$region0: #{tpu_custom_call.1}
  #allocation0 [shape = 'u32[]', space=smem, size = 0x4, offset = 0x4, fixed_abs, tag = 'smem constant byte address 0x4 - core index']
  #allocation1 [shape = 'u32[144,128]{1,0:T(1,128)}', space=vmem, size = 0x12000, scoped, tag = 'internal scratch']
  #allocation2 [shape = 's32[1]{0}', space=sflag, size = 0x4, scoped, tag = 'scoped memory for tpu_custom_call.1']
  #allocation3 [shape = 'u8[512]{0}', space=smem, size = 0x200, scoped, tag = 'prefetched SMEM operand 0']
  %s0 = inlined_call_operand.hbm [shape: f32[3], index: 0, kind: input, shape index: {}]
  %s1 = inlined_call_operand.hbm [shape: f32[2,4,256], index: 1, kind: input, shape index: {}]
  %s2 = inlined_call_operand.hbm [shape: f32[2,4,256], index: 2, kind: output, shape index: {}]
  %s3 = sld [smem:[#allocation0]]
  $region41: #{tpu_custom_call.1} parent=0
    _
  %s5 = ssub.s32 1, %s3
  %s6 = scalar_select 0, %s5, %s3
  %8 = dma.hbm_to_smem %s0, 16, [#allocation3], [#allocation2]
  %9 = dma.done [#allocation2], 16
  %10 = sfence
  $region1: #{tpu_custom_call.1} parent=0
    #allocation4 [shape = 'u8[8192]{0}', space=vmem, size = 0x2000, scoped, tag = 'input window, operand 1']
    #allocation5 [shape = 's32[2]{0}', space=sflag, size = 0x8, scoped, tag = 'scoped memory for tpu_custom_call.1']
    #allocation6 [shape = 's32[2]{0}', space=sflag, size = 0x8, scoped, tag = 'scoped memory for tpu_custom_call.1']
    #allocation7 [shape = 'u8[8192]{0}', space=vmem, size = 0x2000, scoped, tag = 'output window, operand 0']
    %11 = vsyncpa [#allocation5], 0
    %s12 = scalar_lea.sflag [#allocation5], 1
    %13 = vsyncpa %s12, 0
    %14 = vsyncpa [#allocation6], 0
    %s15 = scalar_lea.sflag [#allocation6], 1
    %16 = vsyncpa %s15, 0
    loop: start=0, step=1, limit=4
    $region2: #{tpu_custom_call.1} parent=1 // loop_pre_header
      _
    $region3: #{tpu_custom_call.1} parent=1 // loop_header
      %s18 = sphi 0, %s22
      %p19 = scmp.ge.s32.totalorder %s18, 4
      %s28 = sphi 0, %s30
      %s31 = sphi 0, %s28
      %s32 = sphi 0, %s31
      %s48 = sphi 0, %s32
      %s54 = sphi 0, %s56
      %s57 = sphi 0, %s54
      %s58 = sphi 0, %s57
      %s74 = sphi 0, %s58
    $region4: #{tpu_custom_call.1} parent=1 // loop_header_branch
      %21 = sbr.rel (%p19) target = $region8
    $region5: #{tpu_custom_call.1} parent=1 // loop_body
      %s23 = ssub.s32 %s18, 1
      %s24 = ssub.s32 %s18, 2
      %s25 = sadd.s32 %s18, 1
      %s26 = ssub.s32 %s18, %s25
      %p27 = scmp.eq.s32.totalorder %s26, 0
      %s29 = sadd.s32 %s28, 1
      %s30 = scalar_select %p27, %s28, %s29
      %p33 = pneg %p27
      %p34 = scmp.eq.s32.totalorder %s18, 1
      %p35 = por %p33, %p34
      %p36 = scmp.ne.s32.totalorder %s28, %s31
      %p37 = scmp.eq.s32.totalorder %s18, 0
      %p38 = por %p36, %p37
      %p39 = scmp.ne.s32.totalorder %s28, %s31
      %p40 = scmp.eq.s32.totalorder %s23, 1
      %p41 = por %p39, %p40
      %p42 = scmp.ne.s32.totalorder %s31, %s32
      %p43 = scmp.eq.s32.totalorder %s23, 0
      %p44 = por %p42, %p43
      %p45 = scmp.ne.s32.totalorder %s31, %s32
      %p46 = scmp.eq.s32.totalorder %s24, 1
      %p47 = por %p45, %p46
      %p49 = scmp.ne.s32.totalorder %s32, %s48
      %p50 = scmp.eq.s32.totalorder %s24, 0
      %p51 = por %p49, %p50
      %s52 = ssub.s32 %s18, %s25
      %p53 = scmp.eq.s32.totalorder %s52, 0
      %s55 = sadd.s32 %s54, 1
      %s56 = scalar_select %p53, %s54, %s55
      %p59 = pneg %p53
      %p60 = scmp.eq.s32.totalorder %s18, 1
      %p61 = por %p59, %p60
      %p62 = scmp.ne.s32.totalorder %s54, %s57
      %p63 = scmp.eq.s32.totalorder %s18, 0
      %p64 = por %p62, %p63
      %p65 = scmp.ne.s32.totalorder %s54, %s57
      %p66 = scmp.eq.s32.totalorder %s23, 1
      %p67 = por %p65, %p66
      %p68 = scmp.ne.s32.totalorder %s57, %s58
      %p69 = scmp.eq.s32.totalorder %s23, 0
      %p70 = por %p68, %p69
      %p71 = scmp.ne.s32.totalorder %s57, %s58
      %p72 = scmp.eq.s32.totalorder %s24, 1
      %p73 = por %p71, %p72
      %p75 = scmp.ne.s32.totalorder %s58, %s74
      %p76 = scmp.eq.s32.totalorder %s24, 0
      %p77 = por %p75, %p76
      %p78 = scmp.le.s32.totalorder 1, %s18
      %p79 = scmp.lt.s32.totalorder %s18, 3
      %p80 = pnand %p78, %p79
      %p81 = pneg %p80
      // Predicated region
      $region9: #{tpu_custom_call.1} parent=5 // pred_check
        _
      $region10: #{tpu_custom_call.1} parent=5 // pred_check_branch
        %83 = sbr.rel (%p80) target = $region12
      $region11: #{tpu_custom_call.1} parent=5 // pred_region
        %s84 = ssub.s32 %s18, 1
      $region12: #{tpu_custom_call.1} parent=5 // pred_fallthru
        _
      %p85 = scmp.lt.s32.totalorder %s18, 2
      // Predicated region
      $region13: #{tpu_custom_call.1} parent=5 // pred_check
        %p86 = pneg %p85
      $region14: #{tpu_custom_call.1} parent=5 // pred_check_branch
        %88 = sbr.rel (%p86) target = $region16
      $region15: #{tpu_custom_call.1} parent=5 // pred_region
        // Predicated region
        $region17: #{tpu_custom_call.1} parent=15 // pred_check
          %p89 = pneg %p38
        $region18: #{tpu_custom_call.1} parent=15 // pred_check_branch
          %91 = sbr.rel (%p89) target = $region20
        $region19: #{tpu_custom_call.1} parent=15 // pred_region
          %s92 = sand.u32 %s28, 1
          %s93 = scalar_lea.sflag [#allocation5], %s92
          %s94 = sand.u32 %s28, 1
          %s95 = smul.addr %s94, 8
          %s96 = scalar_lea.vmem [#allocation4], %s95
          %s98 = ssub.s32 128, 128
          %99 = vsyncadd %s93, %s98
          %s100 = smul.addr %s18, 2
          %s101 = smul.addr %s100, 64
          %s102 = scalar_lea.hbm %s1, %s101
          %s104 = sshll.u32 %s96, 4
          %s105 = int_to_ptr.vmem [resolvable:$true] %s104
          %107 = dma.hbm_to_vmem [thread:$0]  %s102, 128, %s105, %s93
        $region20: #{tpu_custom_call.1} parent=15 // pred_fallthru
          _
      $region16: #{tpu_custom_call.1} parent=5 // pred_fallthru
        _
      %p108 = scmp.le.s32.totalorder 1, %s18
      %p109 = scmp.lt.s32.totalorder %s18, 3
      %p110 = pnand %p108, %p109
      %p111 = pneg %p110
      // Predicated region
      $region21: #{tpu_custom_call.1} parent=5 // pred_check
        _
      $region22: #{tpu_custom_call.1} parent=5 // pred_check_branch
        %113 = sbr.rel (%p110) target = $region24
      $region23: #{tpu_custom_call.1} parent=5 // pred_region
        %s114 = ssub.s32 %s18, 1
        %s115 = sand.u32 %s31, 1
        %s116 = scalar_lea.sflag [#allocation5], %s115
        %s117 = sand.u32 %s31, 1
        %s118 = smul.addr %s117, 8
        %s119 = scalar_lea.vmem [#allocation4], %s118
        // Predicated region
        $region25: #{tpu_custom_call.1} parent=23 // pred_check
          %p120 = pneg %p44
        $region26: #{tpu_custom_call.1} parent=23 // pred_check_branch
          %122 = sbr.rel (%p120) target = $region28
        $region27: #{tpu_custom_call.1} parent=23 // pred_region
          %123 = dma.done %s116, 128
        $region28: #{tpu_custom_call.1} parent=23 // pred_fallthru
          _
        %s124 = sand.u32 %s31, 1
        %s125 = scalar_lea.sflag [#allocation5], %s124
        %s126 = sand.u32 %s31, 1
        %s127 = smul.addr %s126, 8
        %s128 = scalar_lea.vmem [#allocation4], %s127
        %p129 = pneg %p44
        %p130 = pneg %p41
        %p131 = pneg %p70
        %p132 = pneg %p67
        %s133 = sand.u32 %s57, 1
        %s134 = scalar_lea.sflag [#allocation6], %s133
        %s135 = sand.u32 %s57, 1
        %s136 = smul.addr %s135, 8
        %s137 = scalar_lea.vmem [#allocation7], %s136
        %v138 = vld [vmem:[%s119] sm:$0xff]
        %v140 = vcombine.high %v138, %v138
        %vm142 = vcmask 1043456
        %v143 = vsel %vm142, %v138, 0.0
        %v144 = vsel %vm142, %v140, 0.0
        %v145 = vadd.f32 %v143, %v144
        %146 = vadd.xlane.f32.xlu0 %v145
        %v147 = vpop.xlane.xlu0 %146
        %v148 = vmul.f32 %v147, 0.00390625
        %v149 = vlaneseq
        %v150 = vand.u32 %v149, 127
        %v152 = vlaneseq
        %v153 = vshrl.u32 %v152, 7
        %v154 = vsub.s32 %v150, %v153
        %v155 = vrot.slane %v148, %v154
        %vm157 = vcmask 1047584
        %158 = vrot.lane.b32.xlu0 %v155, 4
        %v159 = vpop.permute.xlu0 %158
        %v160 = vsel %vm157, %v159, %v155
        %161 = vrot.lane.b32.xlu0 %v160, 4
        %v162 = vpop.permute.xlu0 %161
        %v163 = vsel %vm157, %v162, %v155
        %vm164 = vcmp.ge.s32.totalorder %v150, 1
        %vm165 = vcmp.lt.s32.totalorder %v150, 5
        %vm166 = vmand %vm164, %vm165
        %s167 = sld [smem:[#allocation3]]
        %169 = vrot.lane.b32.xlu0 %v163, 125
        %v170 = vpop.permute.xlu0 %169
        %v172 = vsel %vm166, %v170, 0.0
        %v173 = vstv %s167
        %v174 = vmul.f32 %v173, %v172
        %v175 = vadd.f32 %v174, 0.0
        %s176 = sld [smem:[#allocation3 + $0x1]]
        %v177 = vstv %s176
        %v178 = vmul.f32 %v177, %v148
        %v180 = vlaneseq
        %v181 = vshrl.u32 %v180, 7
        %v182 = vsub.s32 %v150, %v181
        %v183 = vrot.slane %v178, %v182
        %v185 = vadd.f32 %v175, %v183
        %vm186 = vcmp.ge.s32.totalorder %v150, 4294967295
        %vm187 = vcmp.lt.s32.totalorder %v150, 3
        %vm188 = vmand %vm186, %vm187
        %s189 = sld [smem:[#allocation3 + $0x2]]
        %190 = vrot.lane.b32.xlu0 %v163, 127
        %v191 = vpop.permute.xlu0 %190
        %v193 = vsel %vm188, %v191, 0.0
        %v194 = vstv %s189
        %v195 = vmul.f32 %v194, %v193
        %v196 = vadd.f32 %v185, %v195
        %v197 = vxor.u32 %v196, 2147483648
        %v198 = vmul.f32 %v197, 1.442695
        %v199 = vpow.pop %v198
        %v200 = vadd.f32 %v199, 1.0
        %v201 = vrcp.pop %v200
        %v202 = vmul.f32 1.0, %v201
        %v203 = vlaneseq
        %v204 = vshrl.u32 %v203, 7
        %v205 = vsub.s32 0, %v204
        %v206 = vrot.slane %v202, %v205
        %208 = vbcast.lane.b32.xlu0 %v206, 256
        %v209 = vpop.permute.xlu0 %208
        %v212 = vunpack.c.l.s4 839922192
        %v213 = vunpack.c.0.s8 %v212
        %v214 = vlaneseq
        %v215 = vshrl.u32 %v214, 7
        %v216 = vsub.s32 %v213, %v215
        %v217 = vrot.slane %v209, %v216
        %v219 = vmul.f32 %v138, %v217
        %220 = vst [vmem:[%s137] sm:$0xff] %v219
        %s221 = sand.u32 %s57, 1
        %s222 = scalar_lea.sflag [#allocation6], %s221
        %s223 = sand.u32 %s57, 1
        %s224 = smul.addr %s223, 8
        %s225 = scalar_lea.vmem [#allocation7], %s224
        // Predicated region
        $region29: #{tpu_custom_call.1} parent=23 // pred_check
          %p226 = pneg %p67
        $region30: #{tpu_custom_call.1} parent=23 // pred_check_branch
          %228 = sbr.rel (%p226) target = $region32
        $region31: #{tpu_custom_call.1} parent=23 // pred_region
          %s230 = ssub.s32 128, 128
          %231 = vsyncadd %s222, %s230
          %s232 = smul.addr %s23, 2
          %s233 = smul.addr %s232, 64
          %s234 = scalar_lea.hbm %s2, %s233
          %s236 = sshll.u32 %s225, 4
          %s237 = int_to_ptr.vmem [resolvable:$true] %s236
          %239 = dma.vmem_to_hbm [thread:$0]  %s237, 128, %s234, %s222
        $region32: #{tpu_custom_call.1} parent=23 // pred_fallthru
          _
      $region24: #{tpu_custom_call.1} parent=5 // pred_fallthru
        _
      %p240 = scmp.le.s32.totalorder 2, %s18
      // Predicated region
      $region33: #{tpu_custom_call.1} parent=5 // pred_check
        %p241 = pneg %p240
      $region34: #{tpu_custom_call.1} parent=5 // pred_check_branch
        %243 = sbr.rel (%p241) target = $region36
      $region35: #{tpu_custom_call.1} parent=5 // pred_region
        %s244 = ssub.s32 %s18, 2
        // Predicated region
        $region37: #{tpu_custom_call.1} parent=35 // pred_check
          %p245 = pneg %p73
        $region38: #{tpu_custom_call.1} parent=35 // pred_check_branch
          %247 = sbr.rel (%p245) target = $region40
        $region39: #{tpu_custom_call.1} parent=35 // pred_region
          %s248 = sand.u32 %s58, 1
          %s249 = scalar_lea.sflag [#allocation6], %s248
          %s250 = sand.u32 %s58, 1
          %s251 = smul.addr %s250, 8
          %s252 = scalar_lea.vmem [#allocation7], %s251
          %253 = dma.done %s249, 128
        $region40: #{tpu_custom_call.1} parent=35 // pred_fallthru
          _
      $region36: #{tpu_custom_call.1} parent=5 // pred_fallthru
        _
    $region6: #{tpu_custom_call.1} parent=1 // loop_footer
      %s22 = sadd.s32 1, %s18
    $region7: #{tpu_custom_call.1} parent=1 // loop_footer_branch
      %17 = sbr.rel target = $region3
    $region8: #{tpu_custom_call.1} parent=1 // loop_exit
      _
    %254 = vsyncpa [#allocation5], 1
    %s255 = scalar_lea.sflag [#allocation5], 1
    %256 = vsyncpa %s255, 1
    %257 = vsyncpa [#allocation6], 1
    %s258 = scalar_lea.sflag [#allocation6], 1
    %259 = vsyncpa %s258, 1

</llo_original>
